<compile_context>
chip_gen: v7x
topology: tpu7x:2x2x1
jax: 0.10.0
libtpu: 0.0.40
codegen_flags: <defaults>
</compile_context>

<pallas_src>
import functools

import jax
import jax.numpy as jnp
from jax import lax
from jax.experimental import pallas as pl
from jax.experimental.pallas import tpu as pltpu

_TM_TARGET = 16384  # spatial tile target; sweep 8192/16384/32768


def _pick_tile(S, B):
    """Pick spatial tile TM such that (TM % 128 == 0 and TM <= S) or TM == S.

    Ragged last blocks (TM not dividing S) are handled by Pallas block
    padding/masking -- no wrapper pad or output slice.  When B == 1 we prefer
    >= 2 spatial tiles so both v7x TensorCores get work."""
    if S <= _TM_TARGET and (B > 1 or S < 256):
        return S                              # one full-extent tile per batch elem
    TM = min(_TM_TARGET, S)
    TM -= TM % 128                            # lane-aligned, <= S
    if B == 1 and TM >= S:                    # would collapse to a single grid step
        TM = max(128, ((S // 2) // 128) * 128)
    return TM


def _moments_kernel(c_ref, x_ref, mom_ref, *, total_s, tile_s):
    """Per-(batch, tile) raw moments of (x - c) in one pass over x.

    mom[:, :Cin] = sum_t (x_i - c_i)(x_j - c_j),  mom[:, Cin] = sum_t (x_i - c_i)."""
    cin = x_ref.shape[0]
    x = x_ref[...].astype(jnp.float32) - c_ref[...]          # (Cin, TM)
    if total_s % tile_s:                                      # ragged last block:
        lane = lax.broadcasted_iota(jnp.int32, x.shape, 1)    # zero OOB lanes
        x = jnp.where(pl.program_id(1) * tile_s + lane < total_s, x, 0.0)
    for j in range(cin):                                      # Cin is tiny: unroll
        mom_ref[:, j:j + 1] = jnp.sum(x * x[j:j + 1, :], axis=1, keepdims=True)
    mom_ref[:, cin:cin + 1] = jnp.sum(x, axis=1, keepdims=True)


def _fused_conv_bn_relu_kernel(w_ref, shift_ref, x_ref, o_ref):
    """out = relu(W' @ x + shift); W' already has the BN scale folded in.

    Cin is tiny (3), so the contraction is an unrolled VPU outer product
    instead of an MXU matmul (K=3 would waste the systolic array and force
    operand relayouts).  Purely elementwise along the spatial (lane) axis, so
    ragged-block garbage lanes never contaminate valid lanes."""
    x = x_ref[...].astype(jnp.float32)        # (Cin, TM)
    w = w_ref[...]                            # (Cout, Cin)
    y = shift_ref[...]                        # (Cout, 1) -> broadcast over lanes
    for i in range(x.shape[0]):
        y = y + w[:, i:i + 1] * x[i:i + 1, :]
    o_ref[...] = jnp.maximum(y, 0.0).astype(o_ref.dtype)


def weightnet_forward(x, weight, bias, gamma, beta, eps=1e-5):
    B, Cin, K, N = x.shape
    Cout = weight.shape[0]
    S = K * N
    M = B * S

    W = weight.reshape(Cout, Cin).astype(jnp.float32)
    b = bias.astype(jnp.float32)
    g = gamma.astype(jnp.float32)
    bt = beta.astype(jnp.float32)

    x3 = x.reshape(B, Cin, S)                 # contiguous dim merge: free
    TM = _pick_tile(S, B)
    num_tiles = pl.cdiv(S, TM)
    grid = (B, num_tiles)
    cparams = pltpu.CompilerParams(dimension_semantics=("parallel", "parallel"))

    # ---- BN batch statistics from the input side, single pass over x.
    # The 1x1 conv is linear, so mean_y = W mean_x + b and var_y = w^T Cov(x) w
    # (biased).  Moments are taken of (x - c), c = one sample point, so the
    # E[zz^T] - mean(z) mean(z)^T recombination stays well conditioned.
    c = x3[:1, :, :1].astype(jnp.float32).reshape(Cin, 1)
    mom = pl.pallas_call(
        functools.partial(_moments_kernel, total_s=S, tile_s=TM),
        out_shape=jax.ShapeDtypeStruct((B, num_tiles, Cin, Cin + 1), jnp.float32),
        grid_spec=pltpu.PrefetchScalarGridSpec(
            num_scalar_prefetch=0,
            grid=grid,
            in_specs=[
                pl.BlockSpec((Cin, 1), lambda bi, ti: (0, 0)),            # c
                pl.BlockSpec((None, Cin, TM), lambda bi, ti: (bi, 0, ti)),  # x
            ],
            out_specs=pl.BlockSpec((None, None, Cin, Cin + 1),
                                   lambda bi, ti: (bi, ti, 0, 0)),
        ),
        compiler_params=cparams,
    )(c, x3)
    mom = jnp.sum(mom, axis=(0, 1))                       # (Cin, Cin+1), tiny
    sum_xx, sum_x = mom[:, :Cin], mom[:, Cin]
    mean_s = sum_x / M                                    # mean of (x - c)
    mean_x = c[:, 0] + mean_s
    cov_x = sum_xx / M - jnp.outer(mean_s, mean_s)        # (Cin, Cin)

    mean_y = W @ mean_x + b
    var_y = jnp.einsum('oi,ij,oj->o', W, cov_x, W)        # biased batch variance
    scale = g * lax.rsqrt(var_y + eps)
    W2 = W * scale[:, None]                               # fold BN scale into W
    shift2 = ((b - mean_y) * scale + bt).reshape(Cout, 1) # conv bias + BN folded

    # ---- Fused conv + BN + ReLU in native (B, C, S) layout; the (Cout, M)
    # conv intermediate never touches HBM.  No pad / no slice: cdiv grid with
    # Pallas-masked ragged last blocks.
    out3 = pl.pallas_call(
        _fused_conv_bn_relu_kernel,
        out_shape=jax.ShapeDtypeStruct((B, Cout, S), x.dtype),
        grid_spec=pltpu.PrefetchScalarGridSpec(
            num_scalar_prefetch=0,
            grid=grid,
            in_specs=[
                pl.BlockSpec((Cout, Cin), lambda bi, ti: (0, 0)),         # W'
                pl.BlockSpec((Cout, 1), lambda bi, ti: (0, 0)),           # shift
                pl.BlockSpec((None, Cin, TM), lambda bi, ti: (bi, 0, ti)),  # x
            ],
            out_specs=pl.BlockSpec((None, Cout, TM), lambda bi, ti: (bi, 0, ti)),
        ),
        compiler_params=cparams,
    )(W2, shift2, x3)

    return out3.reshape(B, Cout, K, N)                    # free reshape


def weightnet_ref(x, weight, bias, gamma, beta, eps=1e-5):
    """Pure-JAX reference matching PyTorch Conv2d(1x1) + BN(train) + ReLU."""
    w = weight.reshape(weight.shape[0], -1)
    y = jnp.einsum('oc,bckn->bokn', w, x) + bias.reshape(1, -1, 1, 1)
    mean = jnp.mean(y, axis=(0, 2, 3), keepdims=True)
    var = jnp.var(y, axis=(0, 2, 3), keepdims=True)       # biased
    yhat = (y - mean) * lax.rsqrt(var + eps)
    out = yhat * gamma.reshape(1, -1, 1, 1) + beta.reshape(1, -1, 1, 1)
    return jnp.maximum(out, 0.0)


if __name__ == "__main__":
    # WeightNet input is translated neighbor positions: B x 3 x K x N
    B, Cin, K, N = 2, 3, 8, 16
    Cout = 16

    key = jax.random.PRNGKey(0)
    kx, kw, kb = jax.random.split(key, 3)

    x = jax.random.normal(kx, (B, Cin, K, N), dtype=jnp.float32)

    # Deterministic parameter init (Conv2d weight/bias; BN gamma=1, beta=0).
    weight = 0.1 * jax.random.normal(kw, (Cout, Cin, 1, 1), dtype=jnp.float32)
    bias = 0.1 * jax.random.normal(kb, (Cout,), dtype=jnp.float32)
    gamma = jnp.ones((Cout,), dtype=jnp.float32)
    beta = jnp.zeros((Cout,), dtype=jnp.float32)

    out = jax.block_until_ready(weightnet_forward(x, weight, bias, gamma, beta))
    ref = weightnet_ref(x, weight, bias, gamma, beta)
    assert out.shape == (B, Cout, K, N)
    assert jnp.allclose(out, ref, atol=1e-4, rtol=1e-4), "mismatch vs reference"

    # Second check: B == 1 with an odd spatial extent exercises the cdiv grid
    # (ragged, masked last block) and the >=2-tile split for megacore.
    x2 = jax.random.normal(jax.random.PRNGKey(1), (1, Cin, 10, 30), dtype=jnp.float32)
    out2 = jax.block_until_ready(weightnet_forward(x2, weight, bias, gamma, beta))
    ref2 = weightnet_ref(x2, weight, bias, gamma, beta)
    assert out2.shape == (1, Cout, 10, 30)
    assert jnp.allclose(out2, ref2, atol=1e-4, rtol=1e-4), "mismatch vs reference (ragged)"

    print("KERNEL_OK")
</pallas_src>

<mosaic_0001>
module attributes {stable_mosaic.version = 11 : i64} {
  func.func @_moments_kernel(%arg0: i32, %arg1: i32, %arg2: memref<3x1xf32, #tpu.memory_space<vmem>>, %arg3: memref<1x3x128xf32, #tpu.memory_space<vmem>>, %arg4: memref<1x1x3x4xf32, #tpu.memory_space<vmem>>) attributes {dimension_semantics = [#tpu.dimension_semantics<parallel>, #tpu.dimension_semantics<parallel>], iteration_bounds = array<i64: 2, 1>, scalar_prefetch = 0 : i64, scratch_operands = 0 : i64, tpu.core_type = #tpu.core_type<tc>, window_params = [{pipeline_mode = #tpu.pipeline_mode<synchronous>, transform_indices = @transform_0, window_bounds = array<i64: 3, 1>}, {transform_indices = @transform_1, window_bounds = array<i64: 1, 3, 128>}, {transform_indices = @transform_2, window_bounds = array<i64: 1, 1, 3, 4>}]} {
    %c0 = arith.constant 0 : index
    %c0_0 = arith.constant 0 : index
    %c0_1 = arith.constant 0 : index
    %0 = vector.load %arg3[%c0, %c0_0, %c0_1] : memref<1x3x128xf32, #tpu.memory_space<vmem>>, vector<1x3x128xf32>
    %1 = vector.shape_cast %0 : vector<1x3x128xf32> to vector<3x128xf32>
    %c0_2 = arith.constant 0 : index
    %c0_3 = arith.constant 0 : index
    %2 = vector.load %arg2[%c0_2, %c0_3] : memref<3x1xf32, #tpu.memory_space<vmem>>, vector<3x1xf32>
    %3 = vector.broadcast %2 : vector<3x1xf32> to vector<3x128xf32>
    %4 = arith.subf %1, %3 : vector<3x128xf32>
    %5 = vector.extract_strided_slice %4 {offsets = [0, 0], sizes = [1, 128], strides = [1, 1]} : vector<3x128xf32> to vector<1x128xf32>
    %6 = vector.broadcast %5 : vector<1x128xf32> to vector<3x128xf32>
    %7 = arith.mulf %4, %6 : vector<3x128xf32>
    %cst = arith.constant dense<0.000000e+00> : vector<3xf32>
    %8 = vector.multi_reduction <add>, %7, %cst [1] : vector<3x128xf32> to vector<3xf32>
    %9 = vector.shape_cast %8 : vector<3xf32> to vector<3x1xf32>
    %c0_4 = arith.constant 0 : index
    %c0_5 = arith.constant 0 : index
    %c0_6 = arith.constant 0 : index
    %c0_7 = arith.constant 0 : index
    %10 = vector.load %arg4[%c0_4, %c0_5, %c0_6, %c0_7] : memref<1x1x3x4xf32, #tpu.memory_space<vmem>>, vector<1x1x3x1xf32>
    %11 = vector.shape_cast %10 : vector<1x1x3x1xf32> to vector<3x1xf32>
    %12 = vector.shape_cast %9 : vector<3x1xf32> to vector<1x1x3x1xf32>
    tpu.vector_store %arg4[%c0_4, %c0_5, %c0_6, %c0_7], %12 {strides = array<i32>} : memref<1x1x3x4xf32, #tpu.memory_space<vmem>>, vector<1x1x3x1xf32>,
    %13 = vector.extract_strided_slice %4 {offsets = [1, 0], sizes = [1, 128], strides = [1, 1]} : vector<3x128xf32> to vector<1x128xf32>
    %14 = vector.broadcast %13 : vector<1x128xf32> to vector<3x128xf32>
    %15 = arith.mulf %4, %14 : vector<3x128xf32>
    %cst_8 = arith.constant dense<0.000000e+00> : vector<3xf32>
    %16 = vector.multi_reduction <add>, %15, %cst_8 [1] : vector<3x128xf32> to vector<3xf32>
    %17 = vector.shape_cast %16 : vector<3xf32> to vector<3x1xf32>
    %c0_9 = arith.constant 0 : index
    %c0_10 = arith.constant 0 : index
    %c0_11 = arith.constant 0 : index
    %c1 = arith.constant 1 : index
    %18 = vector.load %arg4[%c0_9, %c0_10, %c0_11, %c1] : memref<1x1x3x4xf32, #tpu.memory_space<vmem>>, vector<1x1x3x1xf32>
    %19 = vector.shape_cast %18 : vector<1x1x3x1xf32> to vector<3x1xf32>
    %20 = vector.shape_cast %17 : vector<3x1xf32> to vector<1x1x3x1xf32>
    tpu.vector_store %arg4[%c0_9, %c0_10, %c0_11, %c1], %20 {strides = array<i32>} : memref<1x1x3x4xf32, #tpu.memory_space<vmem>>, vector<1x1x3x1xf32>,
    %21 = vector.extract_strided_slice %4 {offsets = [2, 0], sizes = [1, 128], strides = [1, 1]} : vector<3x128xf32> to vector<1x128xf32>
    %22 = vector.broadcast %21 : vector<1x128xf32> to vector<3x128xf32>
    %23 = arith.mulf %4, %22 : vector<3x128xf32>
    %cst_12 = arith.constant dense<0.000000e+00> : vector<3xf32>
    %24 = vector.multi_reduction <add>, %23, %cst_12 [1] : vector<3x128xf32> to vector<3xf32>
    %25 = vector.shape_cast %24 : vector<3xf32> to vector<3x1xf32>
    %c0_13 = arith.constant 0 : index
    %c0_14 = arith.constant 0 : index
    %c0_15 = arith.constant 0 : index
    %c2 = arith.constant 2 : index
    %26 = vector.load %arg4[%c0_13, %c0_14, %c0_15, %c2] : memref<1x1x3x4xf32, #tpu.memory_space<vmem>>, vector<1x1x3x1xf32>
    %27 = vector.shape_cast %26 : vector<1x1x3x1xf32> to vector<3x1xf32>
    %28 = vector.shape_cast %25 : vector<3x1xf32> to vector<1x1x3x1xf32>
    tpu.vector_store %arg4[%c0_13, %c0_14, %c0_15, %c2], %28 {strides = array<i32>} : memref<1x1x3x4xf32, #tpu.memory_space<vmem>>, vector<1x1x3x1xf32>,
    %cst_16 = arith.constant dense<0.000000e+00> : vector<3xf32>
    %29 = vector.multi_reduction <add>, %4, %cst_16 [1] : vector<3x128xf32> to vector<3xf32>
    %30 = vector.shape_cast %29 : vector<3xf32> to vector<3x1xf32>
    %c0_17 = arith.constant 0 : index
    %c0_18 = arith.constant 0 : index
    %c0_19 = arith.constant 0 : index
    %c3 = arith.constant 3 : index
    %31 = vector.load %arg4[%c0_17, %c0_18, %c0_19, %c3] : memref<1x1x3x4xf32, #tpu.memory_space<vmem>>, vector<1x1x3x1xf32>
    %32 = vector.shape_cast %31 : vector<1x1x3x1xf32> to vector<3x1xf32>
    %33 = vector.shape_cast %30 : vector<3x1xf32> to vector<1x1x3x1xf32>
    tpu.vector_store %arg4[%c0_17, %c0_18, %c0_19, %c3], %33 {strides = array<i32>} : memref<1x1x3x4xf32, #tpu.memory_space<vmem>>, vector<1x1x3x1xf32>,
    return
  }
  func.func @transform_0(%arg0: i32, %arg1: i32) -> (i32, i32) {
    %c0_i32 = arith.constant 0 : i32
    %c0_i32_0 = arith.constant 0 : i32
    %c0_i32_1 = arith.constant 0 : i32
    return %c0_i32, %c0_i32_0 : i32, i32
  }
  func.func @transform_1(%arg0: i32, %arg1: i32) -> (i32, i32, i32) {
    %c0_i32 = arith.constant 0 : i32
    %c0_i32_0 = arith.constant 0 : i32
    return %arg0, %c0_i32, %arg1 : i32, i32, i32
  }
  func.func @transform_2(%arg0: i32, %arg1: i32) -> (i32, i32, i32, i32) {
    %c0_i32 = arith.constant 0 : i32
    %c0_i32_0 = arith.constant 0 : i32
    %c0_i32_1 = arith.constant 0 : i32
    return %arg0, %arg1, %c0_i32, %c0_i32_0 : i32, i32, i32, i32
  }
}

</mosaic_0001>

<llo_original>
// kernel: tpu_custom_call.1
$region0: #{tpu_custom_call.1}
  #allocation0 [shape = 'u32[]', space=smem, size = 0x4, offset = 0x4, fixed_abs, tag = 'smem constant byte address 0x4 - core index']
  #allocation1 [shape = 'u32[144,128]{1,0:T(1,128)}', space=vmem, size = 0x12000, scoped, tag = 'internal scratch']
  %s0 = inlined_call_operand.vmem [shape: f32[3,1], index: 0, kind: input, shape index: {}]
  %s1 = inlined_call_operand.vmem [shape: f32[2,3,128], index: 1, kind: input, shape index: {}]
  %s2 = inlined_call_operand.vmem [shape: f32[2,1,3,4], index: 2, kind: output, shape index: {}]
  %s3 = sld [smem:[#allocation0]]
  $region41: #{tpu_custom_call.1} parent=0
    _
  %s5 = ssub.s32 1, %s3
  %s6 = scalar_select 0, %s5, %s3
  loop: start=0, step=1, limit=4
  $region2: #{tpu_custom_call.1} parent=0 // loop_pre_header
    _
  $region3: #{tpu_custom_call.1} parent=0 // loop_header
    %s8 = sphi 0, %s12
    %p9 = scmp.ge.s32.totalorder %s8, 4
    %s15 = sphi 0, %s27
    %s16 = sphi 0, %s23
    %s17 = sphi 0, %s15
    %s18 = sphi 0, %s16
    %s19 = sphi 0, %s17
    %s20 = sphi 0, %s18
    %s28 = sphi 0, %s28
    %s30 = sphi 0, %s28
    %s31 = sphi 0, %s30
    %s45 = sphi 0, %s31
    %s53 = sphi 0, %s55
    %s56 = sphi 0, %s53
    %s57 = sphi 0, %s56
    %s73 = sphi 0, %s57
    %s81 = sphi 0, %s83
    %s84 = sphi 0, %s81
    %s85 = sphi 0, %s84
    %s101 = sphi 0, %s85
  $region4: #{tpu_custom_call.1} parent=0 // loop_header_branch
    %11 = sbr.rel (%p9) target = $region8
  $region5: #{tpu_custom_call.1} parent=0 // loop_body
    %s13 = ssub.s32 %s8, 1
    %s14 = ssub.s32 %s8, 2
    %s21 = sadd.s32 1, %s16
    %p22 = scmp.ge.s32.totalorder %s21, 1
    %s23 = scalar_select %p22, 0, %s21
    %s24 = sadd.s32 1, %s15
    %s25 = scalar_select %p22, %s24, %s15
    %p26 = scmp.ge.s32.totalorder %s25, 2
    %s27 = scalar_select %p26, 0, %s25
    %s29 = sadd.s32 %s28, 1
    %p32 = scmp.eq.s32.totalorder %s8, 1
    %p33 = scmp.ne.s32.totalorder %s28, %s30
    %p34 = scmp.eq.s32.totalorder %s8, 0
    %p35 = por %p33, %p34
    %p36 = scmp.ne.s32.totalorder %s28, %s30
    %p37 = scmp.eq.s32.totalorder %s13, 1
    %p38 = por %p36, %p37
    %p39 = scmp.ne.s32.totalorder %s30, %s31
    %p40 = scmp.eq.s32.totalorder %s13, 0
    %p41 = por %p39, %p40
    %p42 = scmp.ne.s32.totalorder %s30, %s31
    %p43 = scmp.eq.s32.totalorder %s14, 1
    %p44 = por %p42, %p43
    %p46 = scmp.ne.s32.totalorder %s31, %s45
    %p47 = scmp.eq.s32.totalorder %s14, 0
    %p48 = por %p46, %p47
    %s49 = ssub.s32 %s15, %s27
    %s50 = ssub.s32 %s16, %s23
    %s51 = sor.u32 %s49, %s50
    %p52 = scmp.eq.s32.totalorder %s51, 0
    %s54 = sadd.s32 %s53, 1
    %s55 = scalar_select %p52, %s53, %s54
    %p58 = pneg %p52
    %p59 = scmp.eq.s32.totalorder %s8, 1
    %p60 = por %p58, %p59
    %p61 = scmp.ne.s32.totalorder %s53, %s56
    %p62 = scmp.eq.s32.totalorder %s8, 0
    %p63 = por %p61, %p62
    %p64 = scmp.ne.s32.totalorder %s53, %s56
    %p65 = scmp.eq.s32.totalorder %s13, 1
    %p66 = por %p64, %p65
    %p67 = scmp.ne.s32.totalorder %s56, %s57
    %p68 = scmp.eq.s32.totalorder %s13, 0
    %p69 = por %p67, %p68
    %p70 = scmp.ne.s32.totalorder %s56, %s57
    %p71 = scmp.eq.s32.totalorder %s14, 1
    %p72 = por %p70, %p71
    %p74 = scmp.ne.s32.totalorder %s57, %s73
    %p75 = scmp.eq.s32.totalorder %s14, 0
    %p76 = por %p74, %p75
    %s77 = ssub.s32 %s15, %s27
    %s78 = ssub.s32 %s16, %s23
    %s79 = sor.u32 %s77, %s78
    %p80 = scmp.eq.s32.totalorder %s79, 0
    %s82 = sadd.s32 %s81, 1
    %s83 = scalar_select %p80, %s81, %s82
    %p86 = pneg %p80
    %p87 = scmp.eq.s32.totalorder %s8, 1
    %p88 = por %p86, %p87
    %p89 = scmp.ne.s32.totalorder %s81, %s84
    %p90 = scmp.eq.s32.totalorder %s8, 0
    %p91 = por %p89, %p90
    %p92 = scmp.ne.s32.totalorder %s81, %s84
    %p93 = scmp.eq.s32.totalorder %s13, 1
    %p94 = por %p92, %p93
    %p95 = scmp.ne.s32.totalorder %s84, %s85
    %p96 = scmp.eq.s32.totalorder %s13, 0
    %p97 = por %p95, %p96
    %p98 = scmp.ne.s32.totalorder %s84, %s85
    %p99 = scmp.eq.s32.totalorder %s14, 1
    %p100 = por %p98, %p99
    %p102 = scmp.ne.s32.totalorder %s85, %s101
    %p103 = scmp.eq.s32.totalorder %s14, 0
    %p104 = por %p102, %p103
    %p105 = scmp.le.s32.totalorder 1, %s8
    %p106 = scmp.lt.s32.totalorder %s8, 3
    %p107 = pnand %p105, %p106
    %p108 = pneg %p107
    // Predicated region
    $region9: #{tpu_custom_call.1} parent=5 // pred_check
      _
    $region10: #{tpu_custom_call.1} parent=5 // pred_check_branch
      %110 = sbr.rel (%p107) target = $region12
    $region11: #{tpu_custom_call.1} parent=5 // pred_region
      %s111 = ssub.s32 %s8, 1
      // Predicated region
      $region13: #{tpu_custom_call.1} parent=11 // pred_check
        %p112 = pneg %p41
      $region14: #{tpu_custom_call.1} parent=11 // pred_check_branch
        %114 = sbr.rel (%p112) target = $region16
      $region15: #{tpu_custom_call.1} parent=11 // pred_region
        _
      $region16: #{tpu_custom_call.1} parent=11 // pred_fallthru
        _
    $region12: #{tpu_custom_call.1} parent=5 // pred_fallthru
      _
    %p115 = scmp.lt.s32.totalorder %s8, 2
    // Predicated region
    $region17: #{tpu_custom_call.1} parent=5 // pred_check
      %p116 = pneg %p115
    $region18: #{tpu_custom_call.1} parent=5 // pred_check_branch
      %118 = sbr.rel (%p116) target = $region20
    $region19: #{tpu_custom_call.1} parent=5 // pred_region
      // Predicated region
      $region21: #{tpu_custom_call.1} parent=19 // pred_check
        %p119 = pneg %p63
      $region22: #{tpu_custom_call.1} parent=19 // pred_check_branch
        %121 = sbr.rel (%p119) target = $region24
      $region23: #{tpu_custom_call.1} parent=19 // pred_region
        %p122 = scmp.lt.s32.totalorder %s15, 1
        %s123 = scalar_select %p122, %s15, 1
        %p124 = scmp.lt.s32.totalorder %s16, 0
        %s125 = scalar_select %p124, %s16, 0
        %s126 = sadd.s32 %s125, %s123
        %s127 = smul.addr %s126, 4
        %s128 = scalar_lea.vmem %s1, %s127
      $region24: #{tpu_custom_call.1} parent=19 // pred_fallthru
        _
    $region20: #{tpu_custom_call.1} parent=5 // pred_fallthru
      _
    %p129 = scmp.le.s32.totalorder 1, %s8
    %p130 = scmp.lt.s32.totalorder %s8, 3
    %p131 = pnand %p129, %p130
    %p132 = pneg %p131
    // Predicated region
    $region25: #{tpu_custom_call.1} parent=5 // pred_check
      _
    $region26: #{tpu_custom_call.1} parent=5 // pred_check_branch
      %134 = sbr.rel (%p131) target = $region28
    $region27: #{tpu_custom_call.1} parent=5 // pred_region
      %s135 = ssub.s32 %s8, 1
      %p136 = pneg %p41
      %p137 = pneg %p38
      %p138 = scmp.lt.s32.totalorder %s17, 1
      %s139 = scalar_select %p138, %s17, 1
      %p140 = scmp.lt.s32.totalorder %s18, 0
      %s141 = scalar_select %p140, %s18, 0
      %s142 = sadd.s32 %s141, %s139
      %s143 = smul.addr %s142, 4
      %s144 = scalar_lea.vmem %s1, %s143
      %p145 = pneg %p69
      %p146 = pneg %p66
      %p147 = pneg %p97
      %p148 = pneg %p94
      %p149 = scmp.lt.s32.totalorder %s17, 1
      %s150 = scalar_select %p149, %s17, 1
      %p151 = scmp.lt.s32.totalorder %s18, 0
      %s152 = scalar_select %p151, %s18, 0
      %s153 = sadd.s32 %s152, %s150
      %s154 = smul.addr %s153, 4
      %s155 = scalar_lea.vmem %s2, %s154
      %p156 = scmp.lt.s32.totalorder %s17, 1
      %s157 = scalar_select %p156, %s17, 1
      %p158 = scmp.lt.s32.totalorder %s18, 0
      %s159 = scalar_select %p158, %s18, 0
      %s160 = sadd.s32 %s159, %s157
      %s161 = smul.addr %s160, 4
      %s162 = scalar_lea.vmem %s1, %s161
      %p163 = scmp.lt.s32.totalorder %s17, 1
      %s164 = scalar_select %p163, %s17, 1
      %p165 = scmp.lt.s32.totalorder %s18, 0
      %s166 = scalar_select %p165, %s18, 0
      %s167 = sadd.s32 %s166, %s164
      %s168 = smul.addr %s167, 4
      %s169 = scalar_lea.vmem %s2, %s168
      %v170 = vld [vmem:[%s162] sm:$0x7]
      %v171 = vld [vmem:[%s0] sm:$0x7]
      %173 = vset.pattern.permute.xlu0 0
      %174 = vperm.xlu0 %173, %v171
      %v175 = vpop.permute.xlu0 %174
      %v177 = vsub.f32 %v170, %v175
      %v178 = vlaneseq
      %v179 = vshrl.u32 %v178, 7
      %v180 = vsub.s32 0, %v179
      %v181 = vrot.slane %v177, %v180
      %v182 = vmul.f32 %v177, %v181
      %vm183 = vcmask 1042432
      %v184 = vsel %vm183, %v182, 0.0
      %185 = vadd.xlane.f32.xlu0 %v184
      %v186 = vpop.xlane.xlu0 %185
      %vm187 = vcmask 2048
      %188 = vst.msk [vmem:[%s169] sm:$0x7] %vm187, %v186
      %v189 = vlaneseq
      %v190 = vshrl.u32 %v189, 7
      %v191 = vsub.s32 1, %v190
      %v192 = vrot.slane %v177, %v191
      %v193 = vmul.f32 %v177, %v192
      %v194 = vsel %vm183, %v193, 0.0
      %195 = vadd.xlane.f32.xlu0 %v194
      %v196 = vpop.xlane.xlu0 %195
      %vm197 = vcmask 10248
      %198 = vst.msk [vmem:[%s169] sm:$0x7] %vm197, %v196
      %v199 = vlaneseq
      %v200 = vshrl.u32 %v199, 7
      %v201 = vsub.s32 2, %v200
      %v202 = vrot.slane %v177, %v201
      %v203 = vmul.f32 %v177, %v202
      %v204 = vsel %vm183, %v203, 0.0
      %205 = vadd.xlane.f32.xlu0 %v204
      %v206 = vpop.xlane.xlu0 %205
      %vm207 = vcmask 18448
      %208 = vst.msk [vmem:[%s169] sm:$0x7] %vm207, %v206
      %v209 = vsel %vm183, %v177, 0.0
      %210 = vadd.xlane.f32.xlu0 %v209
      %v211 = vpop.xlane.xlu0 %210
      %vm212 = vcmask 26648
      %213 = vst.msk [vmem:[%s169] sm:$0x7] %vm212, %v211
      %p214 = scmp.lt.s32.totalorder %s17, 1
      %s215 = scalar_select %p214, %s17, 1
      %p216 = scmp.lt.s32.totalorder %s18, 0
      %s217 = scalar_select %p216, %s18, 0
      %s218 = sadd.s32 %s217, %s215
      %s219 = smul.addr %s218, 4
      %s220 = scalar_lea.vmem %s2, %s219
      // Predicated region
      $region29: #{tpu_custom_call.1} parent=27 // pred_check
        %p221 = pneg %p94
      $region30: #{tpu_custom_call.1} parent=27 // pred_check_branch
        %223 = sbr.rel (%p221) target = $region32
      $region31: #{tpu_custom_call.1} parent=27 // pred_region
        _
      $region32: #{tpu_custom_call.1} parent=27 // pred_fallthru
        _
    $region28: #{tpu_custom_call.1} parent=5 // pred_fallthru
      _
    %p224 = scmp.le.s32.totalorder 2, %s8
    // Predicated region
    $region33: #{tpu_custom_call.1} parent=5 // pred_check
      %p225 = pneg %p224
    $region34: #{tpu_custom_call.1} parent=5 // pred_check_branch
      %227 = sbr.rel (%p225) target = $region36
    $region35: #{tpu_custom_call.1} parent=5 // pred_region
      %s228 = ssub.s32 %s8, 2
      // Predicated region
      $region37: #{tpu_custom_call.1} parent=35 // pred_check
        %p229 = pneg %p100
      $region38: #{tpu_custom_call.1} parent=35 // pred_check_branch
        %231 = sbr.rel (%p229) target = $region40
      $region39: #{tpu_custom_call.1} parent=35 // pred_region
        %p232 = scmp.lt.s32.totalorder %s19, 1
        %s233 = scalar_select %p232, %s19, 1
        %p234 = scmp.lt.s32.totalorder %s20, 0
        %s235 = scalar_select %p234, %s20, 0
        %s236 = sadd.s32 %s235, %s233
        %s237 = smul.addr %s236, 4
        %s238 = scalar_lea.vmem %s2, %s237
      $region40: #{tpu_custom_call.1} parent=35 // pred_fallthru
        _
    $region36: #{tpu_custom_call.1} parent=5 // pred_fallthru
      _
  $region6: #{tpu_custom_call.1} parent=0 // loop_footer
    %s12 = sadd.s32 1, %s8
  $region7: #{tpu_custom_call.1} parent=0 // loop_footer_branch
    %7 = sbr.rel target = $region3
  $region8: #{tpu_custom_call.1} parent=0 // loop_exit
    _

</llo_original>
